<compile_context>
chip_gen: v5e
topology: v5e:2x2
jax: 0.10.0
libtpu: 0.0.40
codegen_flags: <defaults>
</compile_context>

<pallas_src>
import jax
import jax.numpy as jnp
from jax import lax
from jax.experimental import pallas as pl
from jax.experimental.pallas import tpu as pltpu

LN_EPS = 1e-5  # nn.LayerNorm default


def _round_up(x, m):
    return (x + m - 1) // m * m


def prenorm_linear_kernel(x_ref, gamma_ref, beta_ref, w_ref, b_ref, o_ref,
                          y_ref):
    """Fused LayerNorm + Linear for one (TM, D) x (D, TN) tile pair.

    Grid is (row_tiles, out_col_tiles).  The normalized / affined activations
    for the current row tile are computed once (at j == 0) and cached in the
    VMEM scratch `y_ref` (matmul input dtype), then reused for every D_out
    column tile.
    """
    j = pl.program_id(1)

    @pl.when(j == 0)
    def _():
        x = x_ref[...].astype(jnp.float32)                      # (TM, D)
        inv_d = 1.0 / x.shape[-1]
        s1 = jnp.sum(x, axis=-1, keepdims=True)                 # (TM, 1)
        s2 = jnp.sum(x * x, axis=-1, keepdims=True)             # (TM, 1)
        mean = s1 * inv_d
        var = s2 * inv_d - mean * mean                          # biased (torch)
        inv_std = lax.rsqrt(var + LN_EPS)
        y = (x - mean) * inv_std
        y = (y * gamma_ref[...].astype(jnp.float32)
             + beta_ref[...].astype(jnp.float32))
        y_ref[...] = y.astype(y_ref.dtype)

    # fn == Linear(D, D_out): MXU matmul in the weight dtype, f32 accumulation.
    out = jnp.dot(y_ref[...], w_ref[...], preferred_element_type=jnp.float32)
    out = out + b_ref[...].astype(jnp.float32)                  # (1, TN) bcast
    o_ref[...] = out.astype(o_ref.dtype)


def prenorm_linear(x, gamma, beta, w, b, *, tile_m=256, tile_n=512):
    """x: (B, N, D) -> (B, N, D_out).  gamma/beta: (D,), w: (D, D_out), b: (D_out,)."""
    B, N, D = x.shape
    D_out = w.shape[1]
    M = B * N

    # Row tile: multiple of 8 sublanes, clamped for small inputs; pad the row
    # count to a whole number of tiles (padded rows are sliced off at the end).
    tm = max(8, min(_round_up(tile_m, 8), _round_up(M, 8)))
    M_pad = _round_up(M, tm)

    # Output-column tile: lane-dense (multiple of 128) when D_out allows it,
    # otherwise the full D_out (e.g. toy sizes).
    if D_out % 128 == 0 and D_out > tile_n and D_out % tile_n == 0:
        tn = tile_n
    else:
        tn = D_out

    x2 = x.reshape(M, D)
    if M_pad != M:
        x2 = jnp.pad(x2, ((0, M_pad - M), (0, 0)))
    gamma2 = gamma.reshape(1, D)
    beta2 = beta.reshape(1, D)
    b2 = b.reshape(1, D_out)

    compute_dtype = w.dtype  # bf16 weights -> bf16 MXU operands, f32 accum.
    grid = (M_pad // tm, D_out // tn)

    # VMEM budget: double-buffered x / W / out tiles + normalized-y scratch.
    def _isz(a):
        return jnp.dtype(a.dtype).itemsize

    vmem_need = (2 * tm * D * _isz(x2)
                 + 2 * D * tn * _isz(w)
                 + 2 * tm * tn * _isz(x)
                 + tm * D * jnp.dtype(compute_dtype).itemsize
                 + 2 * (2 * D * _isz(gamma2) + tn * _isz(b2)))
    vmem_limit = int(max(32 * 1024 * 1024,
                         min(vmem_need + (8 << 20), 48 * 1024 * 1024)))

    cost = pl.CostEstimate(
        flops=2 * M_pad * D * D_out + 8 * M_pad * D,
        transcendentals=M_pad,
        bytes_accessed=(x2.size * _isz(x2)
                        + grid[0] * w.size * _isz(w)
                        + M_pad * D_out * _isz(x)))

    out2 = pl.pallas_call(
        prenorm_linear_kernel,
        out_shape=jax.ShapeDtypeStruct((M_pad, D_out), x.dtype),
        grid_spec=pltpu.PrefetchScalarGridSpec(
            num_scalar_prefetch=0,
            grid=grid,
            in_specs=[
                pl.BlockSpec((tm, D), lambda i, j: (i, 0)),    # x row tile
                pl.BlockSpec((1, D), lambda i, j: (0, 0)),     # gamma
                pl.BlockSpec((1, D), lambda i, j: (0, 0)),     # beta
                pl.BlockSpec((D, tn), lambda i, j: (0, j)),    # W column tile
                pl.BlockSpec((1, tn), lambda i, j: (0, j)),    # bias column tile
            ],
            out_specs=pl.BlockSpec((tm, tn), lambda i, j: (i, j)),
            scratch_shapes=[pltpu.VMEM((tm, D), compute_dtype)],
        ),
        compiler_params=pltpu.CompilerParams(
            dimension_semantics=("parallel", "arbitrary"),
            vmem_limit_bytes=vmem_limit),
        cost_estimate=cost,
    )(x2, gamma2, beta2, w, b2)

    if M_pad != M:
        out2 = out2[:M]
    return out2.reshape(B, N, D_out)


def prenorm_linear_ref(x, gamma, beta, w, b):
    """Pure-JAX reference (f32 math) for sanity checking."""
    xf = x.astype(jnp.float32)
    mean = jnp.mean(xf, axis=-1, keepdims=True)
    var = jnp.mean((xf - mean) ** 2, axis=-1, keepdims=True)
    y = ((xf - mean) * lax.rsqrt(var + LN_EPS) * gamma.astype(jnp.float32)
         + beta.astype(jnp.float32))
    out = y @ w.astype(jnp.float32) + b.astype(jnp.float32)
    return out.astype(x.dtype)


if __name__ == "__main__":
    key = jax.random.PRNGKey(0)
    k_x, k_w, k_b, k_x2, k_w2, k_b2 = jax.random.split(key, 6)

    # --- Test 1: small f32 problem (tight tolerance). ---
    B, N, D, D_out = 2, 8, 32, 32
    x = jax.random.normal(k_x, (B, N, D), dtype=jnp.float32)
    gamma = jnp.ones((D,), jnp.float32)     # LayerNorm defaults
    beta = jnp.zeros((D,), jnp.float32)
    w = jax.random.normal(k_w, (D, D_out), dtype=jnp.float32) * 0.02
    b = jax.random.normal(k_b, (D_out,), dtype=jnp.float32) * 0.02

    out = jax.block_until_ready(prenorm_linear(x, gamma, beta, w, b))
    ref = prenorm_linear_ref(x, gamma, beta, w, b)
    assert out.shape == (B, N, D_out)
    assert jnp.allclose(out, ref, atol=1e-4, rtol=1e-4)

    # --- Test 2: bf16 weights/activations (MXU-friendly path), lane-dense
    # output, row count not a multiple of 8 (exercises padding). ---
    B2, N2, D2, D_out2 = 2, 25, 128, 128
    x_bf = jax.random.normal(k_x2, (B2, N2, D2), jnp.float32).astype(jnp.bfloat16)
    gamma_bf = jnp.ones((D2,), jnp.bfloat16)
    beta_bf = jnp.zeros((D2,), jnp.bfloat16)
    w_bf = (jax.random.normal(k_w2, (D2, D_out2), jnp.float32) * 0.02
            ).astype(jnp.bfloat16)
    b_bf = (jax.random.normal(k_b2, (D_out2,), jnp.float32) * 0.02
            ).astype(jnp.bfloat16)

    out_bf = jax.block_until_ready(
        prenorm_linear(x_bf, gamma_bf, beta_bf, w_bf, b_bf))
    ref_bf = prenorm_linear_ref(x_bf, gamma_bf, beta_bf, w_bf, b_bf)
    assert out_bf.shape == (B2, N2, D_out2)
    assert jnp.allclose(out_bf.astype(jnp.float32), ref_bf.astype(jnp.float32),
                        atol=3e-2, rtol=3e-2)

    print("KERNEL_OK")
</pallas_src>

<mosaic_0001>
module attributes {stable_mosaic.version = 11 : i64} {
  func.func @prenorm_linear_kernel(%arg0: i32, %arg1: i32, %arg2: memref<16x32xf32, #tpu.memory_space<vmem>>, %arg3: memref<1x32xf32, #tpu.memory_space<vmem>>, %arg4: memref<1x32xf32, #tpu.memory_space<vmem>>, %arg5: memref<32x32xf32, #tpu.memory_space<vmem>>, %arg6: memref<1x32xf32, #tpu.memory_space<vmem>>, %arg7: memref<16x32xf32, #tpu.memory_space<vmem>>, %arg8: memref<16x32xf32, #tpu.memory_space<vmem>>) attributes {dimension_semantics = [#tpu.dimension_semantics<parallel>, #tpu.dimension_semantics<arbitrary>], iteration_bounds = array<i64: 1, 1>, scalar_prefetch = 0 : i64, scratch_operands = 1 : i64, tpu.core_type = #tpu.core_type<tc>, window_params = [{transform_indices = @transform_0, window_bounds = array<i64: 16, 32>}, {pipeline_mode = #tpu.pipeline_mode<synchronous>, transform_indices = @transform_1, window_bounds = array<i64: 1, 32>}, {pipeline_mode = #tpu.pipeline_mode<synchronous>, transform_indices = @transform_2, window_bounds = array<i64: 1, 32>}, {transform_indices = @transform_3, window_bounds = array<i64: 32, 32>}, {transform_indices = @transform_4, window_bounds = array<i64: 1, 32>}, {transform_indices = @transform_5, window_bounds = array<i64: 16, 32>}]} {
    %c0_i32 = arith.constant 0 : i32
    %0 = arith.cmpi eq, %arg1, %c0_i32 : i32
    %1 = arith.extui %0 : i1 to i32
    %c0_i32_0 = arith.constant 0 : i32
    %2 = arith.cmpi ne, %1, %c0_i32_0 : i32
    scf.if %2 {
      %c0_8 = arith.constant 0 : index
      %c0_9 = arith.constant 0 : index
      %10 = vector.load %arg2[%c0_8, %c0_9] : memref<16x32xf32, #tpu.memory_space<vmem>>, vector<16x32xf32>
      %cst_10 = arith.constant dense<0.000000e+00> : vector<16xf32>
      %11 = vector.multi_reduction <add>, %10, %cst_10 [1] : vector<16x32xf32> to vector<16xf32>
      %12 = vector.shape_cast %11 : vector<16xf32> to vector<16x1xf32>
      %13 = arith.mulf %10, %10 : vector<16x32xf32>
      %cst_11 = arith.constant dense<0.000000e+00> : vector<16xf32>
      %14 = vector.multi_reduction <add>, %13, %cst_11 [1] : vector<16x32xf32> to vector<16xf32>
      %15 = vector.shape_cast %14 : vector<16xf32> to vector<16x1xf32>
      %cst_12 = arith.constant 3.125000e-02 : f32
      %16 = vector.broadcast %cst_12 : f32 to vector<16x1xf32>
      %17 = arith.mulf %12, %16 : vector<16x1xf32>
      %cst_13 = arith.constant 3.125000e-02 : f32
      %18 = vector.broadcast %cst_13 : f32 to vector<16x1xf32>
      %19 = arith.mulf %15, %18 : vector<16x1xf32>
      %20 = arith.mulf %17, %17 : vector<16x1xf32>
      %21 = arith.subf %19, %20 : vector<16x1xf32>
      %cst_14 = arith.constant 9.99999974E-6 : f32
      %22 = vector.broadcast %cst_14 : f32 to vector<16x1xf32>
      %23 = arith.addf %21, %22 : vector<16x1xf32>
      %24 = math.rsqrt %23 : vector<16x1xf32>
      %25 = vector.broadcast %17 : vector<16x1xf32> to vector<16x32xf32>
      %26 = arith.subf %10, %25 : vector<16x32xf32>
      %27 = vector.broadcast %24 : vector<16x1xf32> to vector<16x32xf32>
      %28 = arith.mulf %26, %27 : vector<16x32xf32>
      %c0_15 = arith.constant 0 : index
      %c0_16 = arith.constant 0 : index
      %29 = vector.load %arg3[%c0_15, %c0_16] : memref<1x32xf32, #tpu.memory_space<vmem>>, vector<1x32xf32>
      %30 = vector.broadcast %29 : vector<1x32xf32> to vector<16x32xf32>
      %31 = arith.mulf %28, %30 : vector<16x32xf32>
      %c0_17 = arith.constant 0 : index
      %c0_18 = arith.constant 0 : index
      %32 = vector.load %arg4[%c0_17, %c0_18] : memref<1x32xf32, #tpu.memory_space<vmem>>, vector<1x32xf32>
      %33 = vector.broadcast %32 : vector<1x32xf32> to vector<16x32xf32>
      %34 = arith.addf %31, %33 : vector<16x32xf32>
      %c0_19 = arith.constant 0 : index
      %c0_20 = arith.constant 0 : index
      %35 = vector.load %arg8[%c0_19, %c0_20] : memref<16x32xf32, #tpu.memory_space<vmem>>, vector<16x32xf32>
      tpu.vector_store %arg8[%c0_19, %c0_20], %34 {strides = array<i32>} : memref<16x32xf32, #tpu.memory_space<vmem>>, vector<16x32xf32>,
    } else {
    }
    %c0 = arith.constant 0 : index
    %c0_1 = arith.constant 0 : index
    %3 = vector.load %arg8[%c0, %c0_1] : memref<16x32xf32, #tpu.memory_space<vmem>>, vector<16x32xf32>
    %c0_2 = arith.constant 0 : index
    %c0_3 = arith.constant 0 : index
    %4 = vector.load %arg5[%c0_2, %c0_3] : memref<32x32xf32, #tpu.memory_space<vmem>>, vector<32x32xf32>
    %cst = arith.constant dense<0.000000e+00> : vector<16x32xf32>
    %5 = tpu.matmul %3, %4, %cst {dimension_numbers = #tpu.dot_dimension_numbers<[1], [0], [0], [1], [0, 0, 1, 1], [], []>} : vector<16x32xf32>, vector<32x32xf32>, vector<16x32xf32> -> vector<16x32xf32>
    %c0_4 = arith.constant 0 : index
    %c0_5 = arith.constant 0 : index
    %6 = vector.load %arg6[%c0_4, %c0_5] : memref<1x32xf32, #tpu.memory_space<vmem>>, vector<1x32xf32>
    %7 = vector.broadcast %6 : vector<1x32xf32> to vector<16x32xf32>
    %8 = arith.addf %5, %7 : vector<16x32xf32>
    %c0_6 = arith.constant 0 : index
    %c0_7 = arith.constant 0 : index
    %9 = vector.load %arg7[%c0_6, %c0_7] : memref<16x32xf32, #tpu.memory_space<vmem>>, vector<16x32xf32>
    tpu.vector_store %arg7[%c0_6, %c0_7], %8 {strides = array<i32>} : memref<16x32xf32, #tpu.memory_space<vmem>>, vector<16x32xf32>,
    return
  }
  func.func @transform_0(%arg0: i32, %arg1: i32) -> (i32, i32) {
    %c0_i32 = arith.constant 0 : i32
    %c0_i32_0 = arith.constant 0 : i32
    return %arg0, %c0_i32 : i32, i32
  }
  func.func @transform_1(%arg0: i32, %arg1: i32) -> (i32, i32) {
    %c0_i32 = arith.constant 0 : i32
    %c0_i32_0 = arith.constant 0 : i32
    %c0_i32_1 = arith.constant 0 : i32
    return %c0_i32, %c0_i32_0 : i32, i32
  }
  func.func @transform_2(%arg0: i32, %arg1: i32) -> (i32, i32) {
    %c0_i32 = arith.constant 0 : i32
    %c0_i32_0 = arith.constant 0 : i32
    %c0_i32_1 = arith.constant 0 : i32
    return %c0_i32, %c0_i32_0 : i32, i32
  }
  func.func @transform_3(%arg0: i32, %arg1: i32) -> (i32, i32) {
    %c0_i32 = arith.constant 0 : i32
    %c0_i32_0 = arith.constant 0 : i32
    return %c0_i32, %arg1 : i32, i32
  }
  func.func @transform_4(%arg0: i32, %arg1: i32) -> (i32, i32) {
    %c0_i32 = arith.constant 0 : i32
    %c0_i32_0 = arith.constant 0 : i32
    return %c0_i32, %arg1 : i32, i32
  }
  func.func @transform_5(%arg0: i32, %arg1: i32) -> (i32, i32) {
    %c0_i32 = arith.constant 0 : i32
    return %arg0, %arg1 : i32, i32
  }
}

</mosaic_0001>

<llo_original>
// kernel: tpu_custom_call.1
$region0: #{tpu_custom_call.1}
  #allocation0 [shape = 'u32[]', space=smem, size = 0x4, offset = 0x4, fixed_abs, tag = 'smem constant byte address 0x4 - core index']
  #allocation1 [shape = 'u32[72,128]{1,0:T(1,128)}', space=vmem, size = 0x9000, scoped, tag = 'internal scratch']
  #allocation2 [shape = 'f32[16,32]{1,0:T(8,128)}', space=vmem, size = 0x2000, scoped, tag = 'scratch operand']
  %s0 = inlined_call_operand.hbm [shape: f32[16,32], index: 0, kind: input, shape index: {}]
  %s1 = inlined_call_operand.hbm [shape: f32[1,32], index: 1, kind: input, shape index: {}]
  %s2 = inlined_call_operand.vmem [shape: f32[1,32], index: 2, kind: input, shape index: {}]
  %s3 = inlined_call_operand.hbm [shape: f32[32,32], index: 3, kind: input, shape index: {}]
  %s4 = inlined_call_operand.vmem [shape: f32[1,32], index: 4, kind: input, shape index: {}]
  %s5 = inlined_call_operand.hbm [shape: f32[16,32], index: 5, kind: output, shape index: {}]
  %s6 = sld [smem:[#allocation0]]
  $region46: #{tpu_custom_call.1} parent=0
    _
  %s8 = ssub.s32 1, %s6
  %s9 = scalar_select 0, %s8, %s6
  $region1: #{tpu_custom_call.1} parent=0
    #allocation3 [shape = 'u8[8192]{0}', space=vmem, size = 0x2000, scoped, tag = 'input window, operand 0, single buffered']
    #allocation4 [shape = 's32[1]{0}', space=sflag, size = 0x4, scoped, tag = 'scoped memory for tpu_custom_call.1']
    #allocation5 [shape = 's32[1]{0}', space=sflag, size = 0x4, scoped, tag = 'scoped memory for tpu_custom_call.1']
    #allocation6 [shape = 'u8[512]{0}', space=vmem, size = 0x400, scoped, tag = 'input window, operand 1, single buffered']
    #allocation7 [shape = 's32[1]{0}', space=sflag, size = 0x4, scoped, tag = 'scoped memory for tpu_custom_call.1']
    #allocation8 [shape = 'u8[16384]{0}', space=vmem, size = 0x4000, scoped, tag = 'input window, operand 3, single buffered']
    #allocation9 [shape = 'u8[8192]{0}', space=vmem, size = 0x2000, scoped, tag = 'output window, operand 0, single buffered']
    %10 = vsyncpa [#allocation4], 0
    %11 = vsyncpa [#allocation7], 0
    %12 = vsyncpa [#allocation5], 0
    // Predicated region
    $region2: #{tpu_custom_call.1} parent=1 // pred_check
      _
    $region3: #{tpu_custom_call.1} parent=1 // pred_check_branch
      %14 = sbr.rel (0) target = $region5
    $region4: #{tpu_custom_call.1} parent=1 // pred_region
      %16 = vsyncadd [#allocation4], 0
      %s17 = sshll.u32 %s0, 4
      %s18 = int_to_ptr.hbm [resolvable:$true] %s17
      %s19 = sshll.u32 [#allocation3], 4
      %s20 = int_to_ptr.vmem [resolvable:$true] %s19
      %25 = dma.hbm_to_vmem [thread:$0]  %s18, 256, %s20, [#allocation4], 128, 128, 8
    $region5: #{tpu_custom_call.1} parent=1 // pred_fallthru
      _
    // Predicated region
    $region6: #{tpu_custom_call.1} parent=1 // pred_check
      _
    $region7: #{tpu_custom_call.1} parent=1 // pred_check_branch
      %27 = sbr.rel (0) target = $region9
    $region8: #{tpu_custom_call.1} parent=1 // pred_region
      %29 = vsyncadd [#allocation7], 0
      %s31 = sshll.u32 %s1, 4
      %s32 = int_to_ptr.hbm [resolvable:$true] %s31
      %s33 = sshll.u32 [#allocation6], 4
      %s34 = int_to_ptr.vmem [resolvable:$true] %s33
      %36 = dma.hbm_to_vmem [thread:$0]  %s32, 16, %s34, [#allocation7]
    $region9: #{tpu_custom_call.1} parent=1 // pred_fallthru
      _
    // Predicated region
    $region10: #{tpu_custom_call.1} parent=1 // pred_check
      _
    $region11: #{tpu_custom_call.1} parent=1 // pred_check_branch
      %38 = sbr.rel (0) target = $region13
    $region12: #{tpu_custom_call.1} parent=1 // pred_region
      _
    $region13: #{tpu_custom_call.1} parent=1 // pred_fallthru
      _
    // Predicated region
    $region14: #{tpu_custom_call.1} parent=1 // pred_check
      _
    $region15: #{tpu_custom_call.1} parent=1 // pred_check_branch
      %40 = sbr.rel (0) target = $region17
    $region16: #{tpu_custom_call.1} parent=1 // pred_region
      %42 = vsyncadd [#allocation7], 0
      %s43 = sshll.u32 %s3, 4
      %s44 = int_to_ptr.hbm [resolvable:$true] %s43
      %s45 = sshll.u32 [#allocation8], 4
      %s46 = int_to_ptr.vmem [resolvable:$true] %s45
      %51 = dma.hbm_to_vmem [thread:$0]  %s44, 512, %s46, [#allocation7], 128, 128, 8
    $region17: #{tpu_custom_call.1} parent=1 // pred_fallthru
      _
    // Predicated region
    $region18: #{tpu_custom_call.1} parent=1 // pred_check
      _
    $region19: #{tpu_custom_call.1} parent=1 // pred_check_branch
      %53 = sbr.rel (0) target = $region21
    $region20: #{tpu_custom_call.1} parent=1 // pred_region
      _
    $region21: #{tpu_custom_call.1} parent=1 // pred_fallthru
      _
    // Predicated region
    $region22: #{tpu_custom_call.1} parent=1 // pred_check
      _
    $region23: #{tpu_custom_call.1} parent=1 // pred_check_branch
      %55 = sbr.rel (0) target = $region25
    $region24: #{tpu_custom_call.1} parent=1 // pred_region
      %57 = dma.done [#allocation4], 256
    $region25: #{tpu_custom_call.1} parent=1 // pred_fallthru
      _
    // Predicated region
    $region26: #{tpu_custom_call.1} parent=1 // pred_check
      _
    $region27: #{tpu_custom_call.1} parent=1 // pred_check_branch
      %59 = sbr.rel (0) target = $region29
    $region28: #{tpu_custom_call.1} parent=1 // pred_region
      %61 = dma.done [#allocation7], 16
    $region29: #{tpu_custom_call.1} parent=1 // pred_fallthru
      _
    // Predicated region
    $region30: #{tpu_custom_call.1} parent=1 // pred_check
      _
    $region31: #{tpu_custom_call.1} parent=1 // pred_check_branch
      %63 = sbr.rel (0) target = $region33
    $region32: #{tpu_custom_call.1} parent=1 // pred_region
      %65 = dma.done [#allocation7], 512
    $region33: #{tpu_custom_call.1} parent=1 // pred_fallthru
      _
    %p66 = scmp.eq.s32.totalorder 0, 0
    // Predicated region
    $region34: #{tpu_custom_call.1} parent=1 // pred_check
      %p67 = pneg %p66
    $region35: #{tpu_custom_call.1} parent=1 // pred_check_branch
      %69 = sbr.rel (%p67) target = $region37
    $region36: #{tpu_custom_call.1} parent=1 // pred_region
      %v70 = vld [vmem:[#allocation3] sm:$0xff]
      %v71 = vld [vmem:[#allocation3 + $0x8] sm:$0xff]
      %vm72 = vcmask 261120
      %v73 = vsel %vm72, %v70, 0.0
      %74 = vadd.xlane.f32.xlu0 %v73
      %v75 = vpop.xlane.xlu0 %74
      %v76 = vsel %vm72, %v71, 0.0
      %77 = vadd.xlane.f32.xlu0 %v76
      %v78 = vpop.xlane.xlu0 %77
      %v79 = vmul.f32 %v70, %v70
      %v80 = vmul.f32 %v71, %v71
      %v81 = vsel %vm72, %v79, 0.0
      %82 = vadd.xlane.f32.xlu0 %v81
      %v83 = vpop.xlane.xlu0 %82
      %v84 = vsel %vm72, %v80, 0.0
      %85 = vadd.xlane.f32.xlu0 %v84
      %v86 = vpop.xlane.xlu0 %85
      %v87 = vmul.f32 %v75, 0.03125
      %v88 = vmul.f32 %v78, 0.03125
      %v89 = vmul.f32 %v83, 0.03125
      %v90 = vmul.f32 %v86, 0.03125
      %v91 = vmul.f32 %v87, %v87
      %v92 = vmul.f32 %v88, %v88
      %v93 = vsub.f32 %v89, %v91
      %v94 = vsub.f32 %v90, %v92
      %v95 = vadd.f32 %v93, 1e-05
      %v96 = vadd.f32 %v94, 1e-05
      %v97 = vrsqrt.pop %v95
      %v98 = vmul.f32 %v97, %v95
      %v99 = vmul.f32 %v98, %v97
      %v100 = vmul.f32 0.5, %v99
      %v101 = vsub.f32 1.5, %v100
      %v102 = vmul.f32 %v97, %v101
      %vm103 = vweird.f32 %v95
      %vm104 = vweird.f32 %v97
      %vm105 = vmor %vm103, %vm104
      %v106 = vsel %vm105, %v97, %v102
      %v107 = vrsqrt.pop %v96
      %v108 = vmul.f32 %v107, %v96
      %v109 = vmul.f32 %v108, %v107
      %v110 = vmul.f32 0.5, %v109
      %v111 = vsub.f32 1.5, %v110
      %v112 = vmul.f32 %v107, %v111
      %vm113 = vweird.f32 %v96
      %vm114 = vweird.f32 %v107
      %vm115 = vmor %vm113, %vm114
      %v116 = vsel %vm115, %v107, %v112
      %v117 = vsub.f32 %v70, %v87
      %v118 = vsub.f32 %v71, %v88
      %v119 = vmul.f32 %v117, %v106
      %v120 = vmul.f32 %v118, %v116
      %v121 = vld [vmem:[#allocation6] sm:$0x1]
      %v123 = vperm.slane %v121, 0
      %v125 = vmul.f32 %v119, %v123
      %v126 = vmul.f32 %v120, %v123
      %v127 = vld [vmem:[%s2] sm:$0x1]
      %v129 = vperm.slane %v127, 0
      %v131 = vadd.f32 %v125, %v129
      %v132 = vadd.f32 %v126, %v129
      %133 = vst.msk [vmem:[#allocation2] sm:$0xff] %vm72, %v131
      %134 = vst.msk [vmem:[#allocation2 + $0x8] sm:$0xff] %vm72, %v132
    $region37: #{tpu_custom_call.1} parent=1 // pred_fallthru
      _
    %v135 = vld [vmem:[#allocation2] sm:$0xff]
    %v136 = vld [vmem:[#allocation2 + $0x8] sm:$0xff]
    %v137 = vld [vmem:[#allocation8] sm:$0xff]
    %v138 = vld [vmem:[#allocation8 + $0x8] sm:$0xff]
    %v139 = vld [vmem:[#allocation8 + $0x10] sm:$0xff]
    %v140 = vld [vmem:[#allocation8 + $0x18] sm:$0xff]
    %v141 = vld [vmem:[%s4] sm:$0x1]
    %v143 = vperm.slane %v141, 0
    %vm145 = vcmask 261120
    %v147 = vsel %vm145, %v135, 0
    %v150 = vsel %vm145, %v136, 0
    %152 = vmatpush.msra.mxu0 0.0
    %153 = vmatpush.msra.mxu0 0.0
    %154 = vmatpush.msra.mxu0 0.0
    %155 = vmatpush.msra.mxu0 0.0
    %156 = vmatpush.msra.mxu0 0.0
    %157 = vmatpush.msra.mxu0 0.0
    %158 = vmatpush.msra.mxu0 0.0
    %159 = vmatpush.msra.mxu0 0.0
    %160 = vmatpush.msra.mxu0 0.0
    %161 = vmatpush.msra.mxu0 0.0
    %162 = vmatpush.msra.mxu0 0.0
    %163 = vmatpush.msra.mxu0 0.0
    %164 = vmatpush.msra.mxu0 %v140
    %165 = vmatpush.msra.mxu0 %v139
    %166 = vmatpush.msra.mxu0 %v138
    %167 = vmatpush.msra.mxu0 %v137
    %168 = vmatmul.f32.gmra.mxu0 %v147
    %v169 = vpop.f32.mrf.mxu0
    %v170 = vadd.f32 %v143, %v169
    %171 = vmatmul.f32.gmra.mxu0 %v150
    %v172 = vpop.f32.mrf.mxu0
    %v173 = vadd.f32 %v143, %v172
    %174 = vdwg.mxu0
    %175 = vst.msk [vmem:[#allocation9] sm:$0xff] %vm145, %v170
    %176 = vst.msk [vmem:[#allocation9 + $0x8] sm:$0xff] %vm145, %v173
    // Predicated region
    $region38: #{tpu_custom_call.1} parent=1 // pred_check
      _
    $region39: #{tpu_custom_call.1} parent=1 // pred_check_branch
      %178 = sbr.rel (0) target = $region41
    $region40: #{tpu_custom_call.1} parent=1 // pred_region
      %180 = vsyncadd [#allocation5], 0
      %s181 = sshll.u32 [#allocation9], 4
      %s182 = int_to_ptr.vmem [resolvable:$true] %s181
      %s183 = sshll.u32 %s5, 4
      %s184 = int_to_ptr.hbm [resolvable:$true] %s183
      %189 = dma.vmem_to_hbm [thread:$0]  %s182, 256, %s184, [#allocation5], 128, 128, 8
    $region41: #{tpu_custom_call.1} parent=1 // pred_fallthru
      _
    // Predicated region
    $region42: #{tpu_custom_call.1} parent=1 // pred_check
      _
    $region43: #{tpu_custom_call.1} parent=1 // pred_check_branch
      %191 = sbr.rel (0) target = $region45
    $region44: #{tpu_custom_call.1} parent=1 // pred_region
      %193 = dma.done [#allocation5], 256
    $region45: #{tpu_custom_call.1} parent=1 // pred_fallthru
      _
    %194 = vsyncpa [#allocation4], 1
    %195 = vsyncpa [#allocation7], 1
    %196 = vsyncpa [#allocation5], 1

</llo_original>
